<compile_context>
chip_gen: v7x
topology: tpu7x:2x2x1
jax: 0.10.0
libtpu: 0.0.40
codegen_flags: <defaults>
</compile_context>

<pallas_src>
import jax
import jax.numpy as jnp
from jax.experimental import pallas as pl
from jax.experimental.pallas import tpu as pltpu


def _round_up(n, m):
    return ((n + m - 1) // m) * m


def _linear_kernel(x_ref, w_ref, b_ref, o_ref):
    # VPU elementwise multiply (broadcast (1,F) weight row over TB sublanes),
    # XLU cross-lane reduction, scalar bias from SMEM; f32 accumulation.
    x = x_ref[...].astype(jnp.float32)                 # (TB, F)
    w = w_ref[...].astype(jnp.float32)                 # (1, F)
    row = jnp.sum(x * w, axis=-1) + b_ref[0]           # (TB,) f32
    # Lane-dense store: write the tile's results along the lane axis.
    o_ref[...] = row[None, :].astype(o_ref.dtype)      # (1, TB)


def fully_connected_layer(x, w, b):
    """Forward pass of nn.Linear(F, 1).

    x: [B, F] float32
    w: [F, 1] float32  (PyTorch fc.weight [1, F], transposed)
    b: [1]    float32  (fc.bias)
    returns [B, 1] float32
    """
    B, F = x.shape
    w_row = w.reshape(1, F)
    b = b.reshape(1).astype(jnp.float32)

    SUB, LANE = 8, 128
    itemsize = x.dtype.itemsize

    # Pad the batch only to the next multiple of 8 sublanes (<= 7 rows),
    # never up to the tile size (the old full-tile pad doubled HBM traffic).
    Bp = _round_up(B, SUB)
    if Bp != B:
        x = jnp.pad(x, ((0, Bp - B), (0, 0)))

    # Batch tile sized by bytes: target ~8 MiB of x per pipeline buffer.
    # TODO(synk): for very wide F (F*4 >> 8 MiB / 128 rows) add an F-axis
    # reduction grid ("arbitrary" axis + VMEM accumulator) instead of one wide tile.
    target_tile_bytes = 8 * 1024 * 1024
    if Bp <= LANE:
        TB = Bp                                   # one tile spanning full dims
    else:
        tb = max(LANE, (target_tile_bytes // (F * itemsize)) // LANE * LANE)
        tb_max = _round_up(Bp, LANE)
        TB = min(tb, tb_max)
        if TB >= tb_max:
            # Whole batch fits one tile: split in two so both v7x TensorCores
            # get work on the "parallel" grid axis.
            TB = max(LANE, _round_up(-(-Bp // 2), LANE))
    num_tiles = -(-Bp // TB)
    Bp_out = num_tiles * TB

    # Explicit scoped-VMEM limit from the actual footprint (double-buffered x
    # tiles + padded resident weight row + double-buffered output slab).
    x_tile_bytes = TB * F * itemsize
    w_tile_bytes = SUB * _round_up(F, LANE) * 4
    o_tile_bytes = SUB * _round_up(TB, LANE) * 4
    footprint = 2 * (x_tile_bytes + w_tile_bytes + o_tile_bytes)
    vmem_limit = max(32 * 1024 * 1024,
                     min(int(footprint * 1.25) + (2 << 20), 56 * 1024 * 1024))

    out = pl.pallas_call(
        _linear_kernel,
        out_shape=jax.ShapeDtypeStruct((1, Bp_out), x.dtype),
        grid_spec=pl.GridSpec(
            grid=(num_tiles,),
            in_specs=[
                # x: pipelined batch tiles (double-buffered; last tile may be
                # partial -- its garbage rows only feed sliced-off outputs).
                pl.BlockSpec((TB, F), lambda i: (i, 0)),
                # weight row: constant index_map -> resident in VMEM.
                pl.BlockSpec((1, F), lambda i: (0, 0)),
                # bias: scalar in SMEM (no padded VMEM tile / extra DMA).
                pl.BlockSpec(memory_space=pltpu.MemorySpace.SMEM),
            ],
            # Lane-dense output slab: unmasked 128-wide stores / dense writeback.
            out_specs=pl.BlockSpec((1, TB), lambda i: (0, i)),
        ),
        compiler_params=pltpu.CompilerParams(
            dimension_semantics=("parallel",),
            vmem_limit_bytes=vmem_limit,
        ),
        cost_estimate=pl.CostEstimate(
            flops=2 * Bp_out * F,
            transcendentals=0,
            bytes_accessed=itemsize * (Bp * F + F + Bp_out) + 4,
        ),
    )(x, w_row, b)

    # (1, Bp_out) -> (B, 1); flatten is row-major so order matches the batch.
    return out.reshape(-1)[:B].reshape(B, 1)


if __name__ == "__main__":
    key = jax.random.PRNGKey(0)
    k_x, k_w = jax.random.split(key)

    batch = 8
    input_features = 32

    # Deterministic Xavier-uniform init for fc.weight (PyTorch shape [1, F]),
    # stored here transposed as [F, 1]; fc.bias initialized to zeros.
    fan_in, fan_out = input_features, 1
    bound = jnp.sqrt(6.0 / (fan_in + fan_out))
    w = jax.random.uniform(
        k_w, (input_features, 1), dtype=jnp.float32, minval=-bound, maxval=bound
    )
    b = jnp.zeros((1,), dtype=jnp.float32)

    x = jax.random.normal(k_x, (batch, input_features), dtype=jnp.float32)

    out = fully_connected_layer(x, w, b)
    jax.block_until_ready(out)

    # Cross-check against plain-JAX reference of the PyTorch forward.
    ref = x @ w + b.reshape(1, 1)
    assert out.shape == (batch, 1)
    assert jnp.allclose(out, ref, atol=1e-5), "mismatch vs reference"

    print("KERNEL_OK")
</pallas_src>

<mosaic_0001>
module attributes {stable_mosaic.version = 11 : i64} {
  func.func @_linear_kernel(%arg0: i32, %arg1: memref<8x32xf32, #tpu.memory_space<vmem>>, %arg2: memref<1x32xf32, #tpu.memory_space<vmem>>, %arg3: memref<1xf32, #tpu.memory_space<smem>>, %arg4: memref<1x8xf32, #tpu.memory_space<vmem>>) attributes {dimension_semantics = [#tpu.dimension_semantics<parallel>], iteration_bounds = array<i64: 1>, scalar_prefetch = 0 : i64, scratch_operands = 0 : i64, tpu.core_type = #tpu.core_type<tc>, window_params = [{transform_indices = @transform_0, window_bounds = array<i64: 8, 32>}, {pipeline_mode = #tpu.pipeline_mode<synchronous>, transform_indices = @transform_1, window_bounds = array<i64: 1, 32>}, {transform_indices = @transform_2, window_bounds = array<i64: 1>}, {transform_indices = @transform_3, window_bounds = array<i64: 1, 8>}]} {
    %c0 = arith.constant 0 : index
    %c0_0 = arith.constant 0 : index
    %0 = vector.load %arg1[%c0, %c0_0] : memref<8x32xf32, #tpu.memory_space<vmem>>, vector<8x32xf32>
    %c0_1 = arith.constant 0 : index
    %c0_2 = arith.constant 0 : index
    %1 = vector.load %arg2[%c0_1, %c0_2] : memref<1x32xf32, #tpu.memory_space<vmem>>, vector<1x32xf32>
    %2 = vector.broadcast %1 : vector<1x32xf32> to vector<8x32xf32>
    %3 = arith.mulf %0, %2 : vector<8x32xf32>
    %cst = arith.constant dense<0.000000e+00> : vector<8xf32>
    %4 = vector.multi_reduction <add>, %3, %cst [1] : vector<8x32xf32> to vector<8xf32>
    %c0_3 = arith.constant 0 : index
    %5 = memref.load %arg3[%c0_3] : memref<1xf32, #tpu.memory_space<smem>>
    %6 = vector.broadcast %5 : f32 to vector<8xf32>
    %7 = arith.addf %4, %6 : vector<8xf32>
    %8 = vector.shape_cast %7 : vector<8xf32> to vector<1x8xf32>
    %c0_4 = arith.constant 0 : index
    %c0_5 = arith.constant 0 : index
    %9 = vector.load %arg4[%c0_4, %c0_5] : memref<1x8xf32, #tpu.memory_space<vmem>>, vector<1x8xf32>
    tpu.vector_store %arg4[%c0_4, %c0_5], %8 {strides = array<i32>} : memref<1x8xf32, #tpu.memory_space<vmem>>, vector<1x8xf32>,
    return
  }
  func.func @transform_0(%arg0: i32) -> (i32, i32) {
    %c0_i32 = arith.constant 0 : i32
    %c0_i32_0 = arith.constant 0 : i32
    return %arg0, %c0_i32 : i32, i32
  }
  func.func @transform_1(%arg0: i32) -> (i32, i32) {
    %c0_i32 = arith.constant 0 : i32
    %c0_i32_0 = arith.constant 0 : i32
    %c0_i32_1 = arith.constant 0 : i32
    return %c0_i32, %c0_i32_0 : i32, i32
  }
  func.func @transform_2(%arg0: i32) -> i32 {
    %c0_i32 = arith.constant 0 : i32
    %c0_i32_0 = arith.constant 0 : i32
    return %c0_i32 : i32
  }
  func.func @transform_3(%arg0: i32) -> (i32, i32) {
    %c0_i32 = arith.constant 0 : i32
    %c0_i32_0 = arith.constant 0 : i32
    return %c0_i32, %arg0 : i32, i32
  }
}

</mosaic_0001>

<llo_original>
// kernel: tpu_custom_call.1
$region0: #{tpu_custom_call.1}
  #allocation0 [shape = 'u32[]', space=smem, size = 0x4, offset = 0x4, fixed_abs, tag = 'smem constant byte address 0x4 - core index']
  #allocation1 [shape = 'u32[144,128]{1,0:T(1,128)}', space=vmem, size = 0x12000, scoped, tag = 'internal scratch']
  #allocation2 [shape = 'f32[1]{0:T(128)S(6)}', space=smem, size = 0x200, scoped, tag = 'scoped memory for tpu_custom_call.1']
  %s0 = inlined_call_operand.hbm [shape: f32[8,32], index: 0, kind: input, shape index: {}]
  %s1 = inlined_call_operand.vmem [shape: f32[1,32], index: 1, kind: input, shape index: {}]
  %s2 = inlined_call_operand.<no memory space> [shape: f32[1], index: 2, kind: input, shape index: {}]
  %s3 = inlined_call_operand.hbm [shape: f32[1,8], index: 3, kind: output, shape index: {}]
  %s4 = sld [smem:[#allocation0]]
  $region26: #{tpu_custom_call.1} parent=0
    _
  %s6 = ssub.s32 1, %s4
  %s7 = scalar_select 0, %s6, %s4
  %8 = sst [smem:[#allocation2]] %s2
  $region1: #{tpu_custom_call.1} parent=0
    #allocation3 [shape = 'u8[4096]{0}', space=vmem, size = 0x1000, scoped, tag = 'input window, operand 0, single buffered']
    #allocation4 [shape = 's32[1]{0}', space=sflag, size = 0x4, scoped, tag = 'scoped memory for tpu_custom_call.1']
    #allocation5 [shape = 's32[1]{0}', space=sflag, size = 0x4, scoped, tag = 'scoped memory for tpu_custom_call.1']
    #allocation6 [shape = 'u8[512]{0}', space=vmem, size = 0x400, scoped, tag = 'output window, operand 0, single buffered']
    %9 = vsyncpa [#allocation4], 0
    %10 = vsyncpa [#allocation5], 0
    // Predicated region
    $region2: #{tpu_custom_call.1} parent=1 // pred_check
      _
    $region3: #{tpu_custom_call.1} parent=1 // pred_check_branch
      %12 = sbr.rel (0) target = $region5
    $region4: #{tpu_custom_call.1} parent=1 // pred_region
      %s14 = ssub.s32 128, 128
      %15 = vsyncadd [#allocation4], %s14
      %s17 = sshll.u32 [#allocation3], 4
      %s18 = int_to_ptr.vmem [resolvable:$true] %s17
      %20 = dma.hbm_to_vmem [thread:$0]  %s0, 128, %s18, [#allocation4]
    $region5: #{tpu_custom_call.1} parent=1 // pred_fallthru
      _
    // Predicated region
    $region6: #{tpu_custom_call.1} parent=1 // pred_check
      _
    $region7: #{tpu_custom_call.1} parent=1 // pred_check_branch
      %22 = sbr.rel (0) target = $region9
    $region8: #{tpu_custom_call.1} parent=1 // pred_region
      _
    $region9: #{tpu_custom_call.1} parent=1 // pred_fallthru
      _
    // Predicated region
    $region10: #{tpu_custom_call.1} parent=1 // pred_check
      _
    $region11: #{tpu_custom_call.1} parent=1 // pred_check_branch
      %24 = sbr.rel (0) target = $region13
    $region12: #{tpu_custom_call.1} parent=1 // pred_region
      _
    $region13: #{tpu_custom_call.1} parent=1 // pred_fallthru
      _
    // Predicated region
    $region14: #{tpu_custom_call.1} parent=1 // pred_check
      _
    $region15: #{tpu_custom_call.1} parent=1 // pred_check_branch
      %26 = sbr.rel (0) target = $region17
    $region16: #{tpu_custom_call.1} parent=1 // pred_region
      %27 = dma.done [#allocation4], 128
    $region17: #{tpu_custom_call.1} parent=1 // pred_fallthru
      _
    %v28 = vld [vmem:[#allocation3] sm:$0xff]
    %v29 = vld [vmem:[%s1] sm:$0x1]
    %v31 = vlaneseq
    %v32 = vshrl.u32 %v31, 7
    %v33 = vsub.s32 0, %v32
    %v34 = vrot.slane %v29, %v33
    %v36 = vmul.f32 %v28, %v34
    %vm37 = vcmask 261120
    %v38 = vsel %vm37, %v36, 0.0
    %39 = vadd.xlane.f32.xlu0 %v38
    %v40 = vpop.xlane.xlu0 %39
    %s41 = sld [smem:[#allocation2]]
    %v42 = vstv %s41
    %v43 = vadd.f32 %v40, %v42
    %v45 = vlaneseq
    %v46 = vand.u32 %v45, 127
    %v47 = vlaneseq
    %v48 = vshrl.u32 %v47, 7
    %v49 = vsub.s32 %v46, %v48
    %v50 = vrot.slane %v43, %v49
    %vm52 = vcmask 57344
    %53 = vst.msk [vmem:[#allocation6] sm:$0x1] %vm52, %v50
    // Predicated region
    $region18: #{tpu_custom_call.1} parent=1 // pred_check
      _
    $region19: #{tpu_custom_call.1} parent=1 // pred_check_branch
      %55 = sbr.rel (0) target = $region21
    $region20: #{tpu_custom_call.1} parent=1 // pred_region
      %s57 = ssub.s32 16, 16
      %58 = vsyncadd [#allocation5], %s57
      %s60 = sshll.u32 [#allocation6], 4
      %s61 = int_to_ptr.vmem [resolvable:$true] %s60
      %63 = dma.vmem_to_hbm [thread:$0]  %s61, 16, %s3, [#allocation5]
    $region21: #{tpu_custom_call.1} parent=1 // pred_fallthru
      _
    // Predicated region
    $region22: #{tpu_custom_call.1} parent=1 // pred_check
      _
    $region23: #{tpu_custom_call.1} parent=1 // pred_check_branch
      %65 = sbr.rel (0) target = $region25
    $region24: #{tpu_custom_call.1} parent=1 // pred_region
      %66 = dma.done [#allocation5], 16
    $region25: #{tpu_custom_call.1} parent=1 // pred_fallthru
      _
    %67 = vsyncpa [#allocation4], 1
    %68 = vsyncpa [#allocation5], 1

</llo_original>
